<compile_context>
chip_gen: v7x
topology: tpu7x:2x2x1
jax: 0.10.0
libtpu: 0.0.40
codegen_flags: <defaults>
</compile_context>

<pallas_src>
import jax
import jax.numpy as jnp
from jax import lax
from jax.experimental import pallas as pl
from jax.experimental.pallas import tpu as pltpu

_LANES = 128
_SUB = 16          # sublane alignment that satisfies both f32 (8) and bf16 (16) tiling
_MAX_TR = 2048     # 2048x128 f32, double-buffered in+out ~= 4 MiB VMEM


def _round_up(a, b):
    return ((a + b - 1) // b) * b


def _kan_kernel(params_ref, bias_ref, x_ref, out_ref):
    # params_ref: (3K,) f32 in SMEM: [centers(K), -1/(2w^2)(K), weights.sum(0)(K)]
    # bias_ref:   (1, 128) f32 in VMEM, resident across the grid (same block idx)
    # x_ref:      (TR, 128) compute-dtype VMEM tile (lane-dense flattened B*D)
    # out_ref:    (TR, 128) f32 VMEM tile
    nk = params_ref.shape[0] // 3
    tr, lanes = x_ref.shape
    cdt = x_ref.dtype

    # Row-chunk size: largest power-of-two <= 64 dividing TR, so the whole
    # x/d/acc chain for a chunk stays in vregs (<= ~24 f32 vregs at rc=64).
    rc = 64
    while rc > 1 and tr % rc != 0:
        rc //= 2
    nchunks = tr // rc

    # Hoist per-k scalars out of the row loop (cheap SMEM scalar reads).
    # TODO(synk): switch to a lax.fori_loop over k if num_kernels grows beyond ~16.
    cs = [params_ref[k].astype(cdt) for k in range(nk)]
    ns = [params_ref[nk + k].astype(cdt) for k in range(nk)]
    ws = [params_ref[2 * nk + k].astype(cdt) for k in range(nk)]

    bias_row = bias_ref[...].astype(cdt)          # (1, 128)

    def row_chunk(c, carry):
        r0 = pl.multiple_of(c * rc, rc)
        x = x_ref[pl.ds(r0, rc), :]               # (rc, 128) in vregs
        acc = jnp.zeros((rc, lanes), cdt)
        for k in range(nk):                       # K is small: static unroll
            d = x - cs[k]
            acc = acc + jnp.exp(d * d * ns[k]) * ws[k]
        out_ref[pl.ds(r0, rc), :] = (acc + bias_row).astype(out_ref.dtype)
        return carry

    lax.fori_loop(0, nchunks, row_chunk, 0)


def kan_layer_forward(x, weights, bias, centers, widths, *, compute_dtype=jnp.float32):
    """Pallas-backed forward of KANLayer.  x: (B, input_dim)."""
    B, D = x.shape
    O, K = weights.shape
    # PyTorch's `+ bias` only broadcasts correctly when input_dim == output_dim.
    assert D == O, "KANLayer forward requires input_dim == output_dim"

    N = B * D
    rows = pl.cdiv(N, _LANES)
    rows_a = _round_up(max(rows, 1), _SUB)        # pad only to the sublane tile

    # Row tile: >= 2 grid blocks whenever possible (v7x has 2 TensorCores and
    # shards the "parallel" axis across them), capped at _MAX_TR. Keep TR a
    # multiple of 64 when large so the in-kernel chunk stays at 64 rows.
    if rows_a >= 2 * _SUB:
        half = _round_up((rows_a + 1) // 2, _SUB)
        if half >= 64:
            half = _round_up(half, 64)
        TR = min(_MAX_TR, half)
    else:
        TR = rows_a
    grid = (pl.cdiv(rows_a, TR),)                 # last block may be partial (masked)

    Np = rows_a * _LANES
    x_flat = x.reshape(-1).astype(jnp.float32)
    if Np > N:
        x_flat = jnp.pad(x_flat, (0, Np - N))     # zero tail, sliced off below
    x2d = x_flat.reshape(rows_a, _LANES).astype(compute_dtype)

    centers_f = centers.astype(jnp.float32)
    neg_inv_two_w2 = -1.0 / (2.0 * widths.astype(jnp.float32) ** 2)
    w_sum = jnp.sum(weights.astype(jnp.float32), axis=0)        # fold the O reduction
    params = jnp.concatenate([centers_f, neg_inv_two_w2, w_sum])  # (3K,) -> SMEM

    # Fold the bias into the kernel as a resident (1,128) lane tile when the
    # flattened lane pattern is row-invariant (128 % D == 0); else add it in
    # the wrapper.
    fold_bias = (_LANES % D == 0)
    if fold_bias:
        bias_row = jnp.tile(bias.astype(jnp.float32), _LANES // D).reshape(1, _LANES)
    else:
        bias_row = jnp.zeros((1, _LANES), jnp.float32)

    out2d = pl.pallas_call(
        _kan_kernel,
        out_shape=jax.ShapeDtypeStruct((rows_a, _LANES), jnp.float32),
        grid_spec=pltpu.PrefetchScalarGridSpec(
            num_scalar_prefetch=0,
            grid=grid,
            in_specs=[
                # Small flat scalar table, resident in SMEM for the whole kernel.
                pl.BlockSpec(memory_space=pltpu.MemorySpace.SMEM),
                # Bias lane tile, same block every step -> resident in VMEM.
                pl.BlockSpec((1, _LANES), lambda i: (0, 0)),
                # Lane-dense input tiles.
                pl.BlockSpec((TR, _LANES), lambda i: (i, 0)),
            ],
            out_specs=pl.BlockSpec((TR, _LANES), lambda i: (i, 0)),
        ),
        compiler_params=pltpu.CompilerParams(
            dimension_semantics=("parallel",),
            # Let XLA fuse the pad/reshape/cast producer into the x operand.
            allow_input_fusion=[False, False, True],
        ),
    )(params, bias_row, x2d)

    out = out2d.reshape(-1)
    if Np > N:
        out = out[:N]
    out = out.reshape(B, D)
    if not fold_bias:
        out = out + bias.astype(jnp.float32)
    return out


def kan_reference(x, weights, bias, centers, widths):
    """Pure-JAX mirror of the PyTorch forward (for verification)."""
    kernels = jnp.exp(-(x[..., None] - centers) ** 2 / (2.0 * widths ** 2))
    activation = jnp.sum(jnp.matmul(kernels, weights.T), axis=-1) + bias
    return activation


if __name__ == "__main__":
    # Deterministic parameter init mirroring KANLayer.__init__
    input_dim = 16
    output_dim = 16      # must equal input_dim for the PyTorch forward to be valid
    num_kernels = 10
    batch = 8

    key = jax.random.PRNGKey(0)
    k_w, k_x, k_b, k_x2, k_w2, k_b2 = jax.random.split(key, 6)

    weights = jax.random.normal(k_w, (output_dim, num_kernels), dtype=jnp.float32)
    bias = jnp.zeros((output_dim,), dtype=jnp.float32)
    centers = jnp.linspace(-1.0, 1.0, num_kernels, dtype=jnp.float32)
    widths = jnp.ones((num_kernels,), dtype=jnp.float32) * 0.1
    x = jax.random.normal(k_x, (batch, input_dim), dtype=jnp.float32)

    # f32 path, zero bias (module default init).
    out = jax.block_until_ready(kan_layer_forward(x, weights, bias, centers, widths))
    ref = kan_reference(x, weights, bias, centers, widths)
    assert out.shape == ref.shape == (batch, input_dim)
    assert jnp.allclose(out, ref, atol=1e-5, rtol=1e-5), "mismatch vs reference (f32)"

    # f32 path with a non-zero bias (exercises the in-kernel bias fold).
    bias_nz = jax.random.normal(k_b, (output_dim,), dtype=jnp.float32)
    out_b = jax.block_until_ready(kan_layer_forward(x, weights, bias_nz, centers, widths))
    ref_b = kan_reference(x, weights, bias_nz, centers, widths)
    assert jnp.allclose(out_b, ref_b, atol=1e-5, rtol=1e-5), "mismatch vs reference (bias)"

    # f32 path where 128 % D != 0 (exercises tail padding + wrapper bias add).
    D2, B2 = 24, 6
    w2 = jax.random.normal(k_w2, (D2, num_kernels), dtype=jnp.float32)
    b2 = jax.random.normal(k_b2, (D2,), dtype=jnp.float32)
    x2 = jax.random.normal(k_x2, (B2, D2), dtype=jnp.float32)
    out2 = jax.block_until_ready(kan_layer_forward(x2, w2, b2, centers, widths))
    ref2 = kan_reference(x2, w2, b2, centers, widths)
    assert jnp.allclose(out2, ref2, atol=1e-5, rtol=1e-5), "mismatch vs reference (D=24)"

    # Optional bf16 compute path on v6e / v7x (bf16 VPU/EUP); looser tolerance.
    kind = jax.devices()[0].device_kind.lower()
    if ("v6" in kind) or ("v7" in kind) or ("7x" in kind):
        out_bf16 = jax.block_until_ready(
            kan_layer_forward(x, weights, bias, centers, widths,
                              compute_dtype=jnp.bfloat16))
        assert jnp.allclose(out_bf16, ref, atol=2.5e-1, rtol=1e-1), "bf16 path mismatch"

    print("KERNEL_OK")
</pallas_src>

<mosaic_0001>
module attributes {stable_mosaic.version = 11 : i64} {
  func.func @_kan_kernel(%arg0: i32, %arg1: memref<30xf32, #tpu.memory_space<smem>>, %arg2: memref<1x128xf32, #tpu.memory_space<vmem>>, %arg3: memref<16x128xf32, #tpu.memory_space<vmem>>, %arg4: memref<16x128xf32, #tpu.memory_space<vmem>>) attributes {dimension_semantics = [#tpu.dimension_semantics<parallel>], iteration_bounds = array<i64: 1>, scalar_prefetch = 0 : i64, scratch_operands = 0 : i64, tpu.core_type = #tpu.core_type<tc>, window_params = [{transform_indices = @transform_0, window_bounds = array<i64: 30>}, {pipeline_mode = #tpu.pipeline_mode<synchronous>, transform_indices = @transform_1, window_bounds = array<i64: 1, 128>}, {transform_indices = @transform_2, window_bounds = array<i64: 16, 128>}, {transform_indices = @transform_3, window_bounds = array<i64: 16, 128>}]} {
    %c0 = arith.constant 0 : index
    %0 = memref.load %arg1[%c0] : memref<30xf32, #tpu.memory_space<smem>>
    %c1 = arith.constant 1 : index
    %1 = memref.load %arg1[%c1] : memref<30xf32, #tpu.memory_space<smem>>
    %c2 = arith.constant 2 : index
    %2 = memref.load %arg1[%c2] : memref<30xf32, #tpu.memory_space<smem>>
    %c3 = arith.constant 3 : index
    %3 = memref.load %arg1[%c3] : memref<30xf32, #tpu.memory_space<smem>>
    %c4 = arith.constant 4 : index
    %4 = memref.load %arg1[%c4] : memref<30xf32, #tpu.memory_space<smem>>
    %c5 = arith.constant 5 : index
    %5 = memref.load %arg1[%c5] : memref<30xf32, #tpu.memory_space<smem>>
    %c6 = arith.constant 6 : index
    %6 = memref.load %arg1[%c6] : memref<30xf32, #tpu.memory_space<smem>>
    %c7 = arith.constant 7 : index
    %7 = memref.load %arg1[%c7] : memref<30xf32, #tpu.memory_space<smem>>
    %c8 = arith.constant 8 : index
    %8 = memref.load %arg1[%c8] : memref<30xf32, #tpu.memory_space<smem>>
    %c9 = arith.constant 9 : index
    %9 = memref.load %arg1[%c9] : memref<30xf32, #tpu.memory_space<smem>>
    %c10 = arith.constant 10 : index
    %10 = memref.load %arg1[%c10] : memref<30xf32, #tpu.memory_space<smem>>
    %c11 = arith.constant 11 : index
    %11 = memref.load %arg1[%c11] : memref<30xf32, #tpu.memory_space<smem>>
    %c12 = arith.constant 12 : index
    %12 = memref.load %arg1[%c12] : memref<30xf32, #tpu.memory_space<smem>>
    %c13 = arith.constant 13 : index
    %13 = memref.load %arg1[%c13] : memref<30xf32, #tpu.memory_space<smem>>
    %c14 = arith.constant 14 : index
    %14 = memref.load %arg1[%c14] : memref<30xf32, #tpu.memory_space<smem>>
    %c15 = arith.constant 15 : index
    %15 = memref.load %arg1[%c15] : memref<30xf32, #tpu.memory_space<smem>>
    %c16 = arith.constant 16 : index
    %16 = memref.load %arg1[%c16] : memref<30xf32, #tpu.memory_space<smem>>
    %c17 = arith.constant 17 : index
    %17 = memref.load %arg1[%c17] : memref<30xf32, #tpu.memory_space<smem>>
    %c18 = arith.constant 18 : index
    %18 = memref.load %arg1[%c18] : memref<30xf32, #tpu.memory_space<smem>>
    %c19 = arith.constant 19 : index
    %19 = memref.load %arg1[%c19] : memref<30xf32, #tpu.memory_space<smem>>
    %c20 = arith.constant 20 : index
    %20 = memref.load %arg1[%c20] : memref<30xf32, #tpu.memory_space<smem>>
    %c21 = arith.constant 21 : index
    %21 = memref.load %arg1[%c21] : memref<30xf32, #tpu.memory_space<smem>>
    %c22 = arith.constant 22 : index
    %22 = memref.load %arg1[%c22] : memref<30xf32, #tpu.memory_space<smem>>
    %c23 = arith.constant 23 : index
    %23 = memref.load %arg1[%c23] : memref<30xf32, #tpu.memory_space<smem>>
    %c24 = arith.constant 24 : index
    %24 = memref.load %arg1[%c24] : memref<30xf32, #tpu.memory_space<smem>>
    %c25 = arith.constant 25 : index
    %25 = memref.load %arg1[%c25] : memref<30xf32, #tpu.memory_space<smem>>
    %c26 = arith.constant 26 : index
    %26 = memref.load %arg1[%c26] : memref<30xf32, #tpu.memory_space<smem>>
    %c27 = arith.constant 27 : index
    %27 = memref.load %arg1[%c27] : memref<30xf32, #tpu.memory_space<smem>>
    %c28 = arith.constant 28 : index
    %28 = memref.load %arg1[%c28] : memref<30xf32, #tpu.memory_space<smem>>
    %c29 = arith.constant 29 : index
    %29 = memref.load %arg1[%c29] : memref<30xf32, #tpu.memory_space<smem>>
    %c0_0 = arith.constant 0 : index
    %c0_1 = arith.constant 0 : index
    %30 = vector.load %arg2[%c0_0, %c0_1] : memref<1x128xf32, #tpu.memory_space<vmem>>, vector<1x128xf32>
    %c0_i32 = arith.constant 0 : i32
    %c16_i32 = arith.constant 16 : i32
    %31 = arith.muli %c0_i32, %c16_i32 : i32
    %32 = tpu.assume_multiple %31, 16 : i32
    %33 = arith.index_cast %32 : i32 to index
    %c0_2 = arith.constant 0 : index
    %34 = vector.load %arg3[%33, %c0_2] : memref<16x128xf32, #tpu.memory_space<vmem>>, vector<16x128xf32>
    %cst = arith.constant 0.000000e+00 : f32
    %35 = vector.broadcast %cst : f32 to vector<16x128xf32>
    %36 = vector.broadcast %0 : f32 to vector<16x128xf32>
    %37 = arith.subf %34, %36 : vector<16x128xf32>
    %38 = arith.mulf %37, %37 : vector<16x128xf32>
    %39 = vector.broadcast %10 : f32 to vector<16x128xf32>
    %40 = arith.mulf %38, %39 : vector<16x128xf32>
    %41 = math.exp %40 : vector<16x128xf32>
    %42 = vector.broadcast %20 : f32 to vector<16x128xf32>
    %43 = arith.mulf %41, %42 : vector<16x128xf32>
    %44 = arith.addf %35, %43 : vector<16x128xf32>
    %45 = vector.broadcast %1 : f32 to vector<16x128xf32>
    %46 = arith.subf %34, %45 : vector<16x128xf32>
    %47 = arith.mulf %46, %46 : vector<16x128xf32>
    %48 = vector.broadcast %11 : f32 to vector<16x128xf32>
    %49 = arith.mulf %47, %48 : vector<16x128xf32>
    %50 = math.exp %49 : vector<16x128xf32>
    %51 = vector.broadcast %21 : f32 to vector<16x128xf32>
    %52 = arith.mulf %50, %51 : vector<16x128xf32>
    %53 = arith.addf %44, %52 : vector<16x128xf32>
    %54 = vector.broadcast %2 : f32 to vector<16x128xf32>
    %55 = arith.subf %34, %54 : vector<16x128xf32>
    %56 = arith.mulf %55, %55 : vector<16x128xf32>
    %57 = vector.broadcast %12 : f32 to vector<16x128xf32>
    %58 = arith.mulf %56, %57 : vector<16x128xf32>
    %59 = math.exp %58 : vector<16x128xf32>
    %60 = vector.broadcast %22 : f32 to vector<16x128xf32>
    %61 = arith.mulf %59, %60 : vector<16x128xf32>
    %62 = arith.addf %53, %61 : vector<16x128xf32>
    %63 = vector.broadcast %3 : f32 to vector<16x128xf32>
    %64 = arith.subf %34, %63 : vector<16x128xf32>
    %65 = arith.mulf %64, %64 : vector<16x128xf32>
    %66 = vector.broadcast %13 : f32 to vector<16x128xf32>
    %67 = arith.mulf %65, %66 : vector<16x128xf32>
    %68 = math.exp %67 : vector<16x128xf32>
    %69 = vector.broadcast %23 : f32 to vector<16x128xf32>
    %70 = arith.mulf %68, %69 : vector<16x128xf32>
    %71 = arith.addf %62, %70 : vector<16x128xf32>
    %72 = vector.broadcast %4 : f32 to vector<16x128xf32>
    %73 = arith.subf %34, %72 : vector<16x128xf32>
    %74 = arith.mulf %73, %73 : vector<16x128xf32>
    %75 = vector.broadcast %14 : f32 to vector<16x128xf32>
    %76 = arith.mulf %74, %75 : vector<16x128xf32>
    %77 = math.exp %76 : vector<16x128xf32>
    %78 = vector.broadcast %24 : f32 to vector<16x128xf32>
    %79 = arith.mulf %77, %78 : vector<16x128xf32>
    %80 = arith.addf %71, %79 : vector<16x128xf32>
    %81 = vector.broadcast %5 : f32 to vector<16x128xf32>
    %82 = arith.subf %34, %81 : vector<16x128xf32>
    %83 = arith.mulf %82, %82 : vector<16x128xf32>
    %84 = vector.broadcast %15 : f32 to vector<16x128xf32>
    %85 = arith.mulf %83, %84 : vector<16x128xf32>
    %86 = math.exp %85 : vector<16x128xf32>
    %87 = vector.broadcast %25 : f32 to vector<16x128xf32>
    %88 = arith.mulf %86, %87 : vector<16x128xf32>
    %89 = arith.addf %80, %88 : vector<16x128xf32>
    %90 = vector.broadcast %6 : f32 to vector<16x128xf32>
    %91 = arith.subf %34, %90 : vector<16x128xf32>
    %92 = arith.mulf %91, %91 : vector<16x128xf32>
    %93 = vector.broadcast %16 : f32 to vector<16x128xf32>
    %94 = arith.mulf %92, %93 : vector<16x128xf32>
    %95 = math.exp %94 : vector<16x128xf32>
    %96 = vector.broadcast %26 : f32 to vector<16x128xf32>
    %97 = arith.mulf %95, %96 : vector<16x128xf32>
    %98 = arith.addf %89, %97 : vector<16x128xf32>
    %99 = vector.broadcast %7 : f32 to vector<16x128xf32>
    %100 = arith.subf %34, %99 : vector<16x128xf32>
    %101 = arith.mulf %100, %100 : vector<16x128xf32>
    %102 = vector.broadcast %17 : f32 to vector<16x128xf32>
    %103 = arith.mulf %101, %102 : vector<16x128xf32>
    %104 = math.exp %103 : vector<16x128xf32>
    %105 = vector.broadcast %27 : f32 to vector<16x128xf32>
    %106 = arith.mulf %104, %105 : vector<16x128xf32>
    %107 = arith.addf %98, %106 : vector<16x128xf32>
    %108 = vector.broadcast %8 : f32 to vector<16x128xf32>
    %109 = arith.subf %34, %108 : vector<16x128xf32>
    %110 = arith.mulf %109, %109 : vector<16x128xf32>
    %111 = vector.broadcast %18 : f32 to vector<16x128xf32>
    %112 = arith.mulf %110, %111 : vector<16x128xf32>
    %113 = math.exp %112 : vector<16x128xf32>
    %114 = vector.broadcast %28 : f32 to vector<16x128xf32>
    %115 = arith.mulf %113, %114 : vector<16x128xf32>
    %116 = arith.addf %107, %115 : vector<16x128xf32>
    %117 = vector.broadcast %9 : f32 to vector<16x128xf32>
    %118 = arith.subf %34, %117 : vector<16x128xf32>
    %119 = arith.mulf %118, %118 : vector<16x128xf32>
    %120 = vector.broadcast %19 : f32 to vector<16x128xf32>
    %121 = arith.mulf %119, %120 : vector<16x128xf32>
    %122 = math.exp %121 : vector<16x128xf32>
    %123 = vector.broadcast %29 : f32 to vector<16x128xf32>
    %124 = arith.mulf %122, %123 : vector<16x128xf32>
    %125 = arith.addf %116, %124 : vector<16x128xf32>
    %126 = vector.broadcast %30 : vector<1x128xf32> to vector<16x128xf32>
    %127 = arith.addf %125, %126 : vector<16x128xf32>
    %128 = arith.index_cast %32 : i32 to index
    %c0_3 = arith.constant 0 : index
    %129 = vector.load %arg4[%128, %c0_3] : memref<16x128xf32, #tpu.memory_space<vmem>>, vector<16x128xf32>
    tpu.vector_store %arg4[%128, %c0_3], %127 {strides = array<i32>} : memref<16x128xf32, #tpu.memory_space<vmem>>, vector<16x128xf32>,
    %c1_i32 = arith.constant 1 : i32
    return
  }
  func.func @transform_0(%arg0: i32) -> i32 {
    %c0_i32 = arith.constant 0 : i32
    %c0_i32_0 = arith.constant 0 : i32
    return %c0_i32 : i32
  }
  func.func @transform_1(%arg0: i32) -> (i32, i32) {
    %c0_i32 = arith.constant 0 : i32
    %c0_i32_0 = arith.constant 0 : i32
    %c0_i32_1 = arith.constant 0 : i32
    return %c0_i32, %c0_i32_0 : i32, i32
  }
  func.func @transform_2(%arg0: i32) -> (i32, i32) {
    %c0_i32 = arith.constant 0 : i32
    %c0_i32_0 = arith.constant 0 : i32
    return %arg0, %c0_i32 : i32, i32
  }
  func.func @transform_3(%arg0: i32) -> (i32, i32) {
    %c0_i32 = arith.constant 0 : i32
    %c0_i32_0 = arith.constant 0 : i32
    return %arg0, %c0_i32 : i32, i32
  }
}

</mosaic_0001>

<llo_original>
// kernel: tpu_custom_call.1
$region0: #{tpu_custom_call.1}
  #allocation0 [shape = 'u32[]', space=smem, size = 0x4, offset = 0x4, fixed_abs, tag = 'smem constant byte address 0x4 - core index']
  #allocation1 [shape = 'u32[144,128]{1,0:T(1,128)}', space=vmem, size = 0x12000, scoped, tag = 'internal scratch']
  %s0 = inlined_call_operand.hbm [shape: f32[30], index: 0, kind: input, shape index: {}]
  %s1 = inlined_call_operand.vmem [shape: f32[1,128], index: 1, kind: input, shape index: {}]
  %s2 = inlined_call_operand.hbm [shape: f32[16,128], index: 2, kind: input, shape index: {}]
  %s3 = inlined_call_operand.hbm [shape: f32[16,128], index: 3, kind: output, shape index: {}]
  %s4 = sld [smem:[#allocation0]]
  $region30: #{tpu_custom_call.1} parent=0
    _
  %s6 = ssub.s32 1, %s4
  %s7 = scalar_select 0, %s6, %s4
  $region1: #{tpu_custom_call.1} parent=0
    #allocation2 [shape = 'u8[512]{0}', space=smem, size = 0x200, scoped, tag = 'input window, operand 0, single buffered']
    #allocation3 [shape = 's32[1]{0}', space=sflag, size = 0x4, scoped, tag = 'scoped memory for tpu_custom_call.1']
    #allocation4 [shape = 's32[1]{0}', space=sflag, size = 0x4, scoped, tag = 'scoped memory for tpu_custom_call.1']
    #allocation5 [shape = 's32[1]{0}', space=sflag, size = 0x4, scoped, tag = 'scoped memory for tpu_custom_call.1']
    #allocation6 [shape = 'u8[8192]{0}', space=vmem, size = 0x2000, scoped, tag = 'input window, operand 2, single buffered']
    #allocation7 [shape = 'u8[8192]{0}', space=vmem, size = 0x2000, scoped, tag = 'output window, operand 0, single buffered']
    %8 = vsyncpa [#allocation5], 0
    %9 = vsyncpa [#allocation3], 0
    %10 = vsyncpa [#allocation4], 0
    // Predicated region
    $region2: #{tpu_custom_call.1} parent=1 // pred_check
      _
    $region3: #{tpu_custom_call.1} parent=1 // pred_check_branch
      %12 = sbr.rel (0) target = $region5
    $region4: #{tpu_custom_call.1} parent=1 // pred_region
      %s14 = ssub.s32 16, 16
      %15 = vsyncadd [#allocation5], %s14
      %18 = dma.hbm_to_smem %s0, 16, [#allocation2], [#allocation5]
    $region5: #{tpu_custom_call.1} parent=1 // pred_fallthru
      _
    // Predicated region
    $region6: #{tpu_custom_call.1} parent=1 // pred_check
      _
    $region7: #{tpu_custom_call.1} parent=1 // pred_check_branch
      %20 = sbr.rel (0) target = $region9
    $region8: #{tpu_custom_call.1} parent=1 // pred_region
      _
    $region9: #{tpu_custom_call.1} parent=1 // pred_fallthru
      _
    // Predicated region
    $region10: #{tpu_custom_call.1} parent=1 // pred_check
      _
    $region11: #{tpu_custom_call.1} parent=1 // pred_check_branch
      %22 = sbr.rel (0) target = $region13
    $region12: #{tpu_custom_call.1} parent=1 // pred_region
      %s24 = ssub.s32 256, 256
      %25 = vsyncadd [#allocation3], %s24
      %s26 = sshll.u32 [#allocation6], 4
      %s27 = int_to_ptr.vmem [resolvable:$true] %s26
      %32 = dma.hbm_to_vmem [thread:$0]  %s2, 256, %s27, [#allocation3], 128, 128, 8
    $region13: #{tpu_custom_call.1} parent=1 // pred_fallthru
      _
    // Predicated region
    $region14: #{tpu_custom_call.1} parent=1 // pred_check
      _
    $region15: #{tpu_custom_call.1} parent=1 // pred_check_branch
      %34 = sbr.rel (0) target = $region17
    $region16: #{tpu_custom_call.1} parent=1 // pred_region
      %35 = dma.done [#allocation5], 16
    $region17: #{tpu_custom_call.1} parent=1 // pred_fallthru
      _
    // Predicated region
    $region18: #{tpu_custom_call.1} parent=1 // pred_check
      _
    $region19: #{tpu_custom_call.1} parent=1 // pred_check_branch
      %37 = sbr.rel (0) target = $region21
    $region20: #{tpu_custom_call.1} parent=1 // pred_region
      %38 = dma.done [#allocation3], 256
    $region21: #{tpu_custom_call.1} parent=1 // pred_fallthru
      _
    %39 = sfence
    %s40 = sld [smem:[#allocation2]]
    %s41 = sld [smem:[#allocation2 + $0x1]]
    %s42 = sld [smem:[#allocation2 + $0x2]]
    %s43 = sld [smem:[#allocation2 + $0x3]]
    %s44 = sld [smem:[#allocation2 + $0x4]]
    %s45 = sld [smem:[#allocation2 + $0x5]]
    %s46 = sld [smem:[#allocation2 + $0x6]]
    %s47 = sld [smem:[#allocation2 + $0x7]]
    %s48 = sld [smem:[#allocation2 + $0x8]]
    %s49 = sld [smem:[#allocation2 + $0x9]]
    %s50 = sld [smem:[#allocation2 + $0xa]]
    %s51 = sld [smem:[#allocation2 + $0xb]]
    %s52 = sld [smem:[#allocation2 + $0xc]]
    %s53 = sld [smem:[#allocation2 + $0xd]]
    %s54 = sld [smem:[#allocation2 + $0xe]]
    %s55 = sld [smem:[#allocation2 + $0xf]]
    %s56 = sld [smem:[#allocation2 + $0x10]]
    %s57 = sld [smem:[#allocation2 + $0x11]]
    %s58 = sld [smem:[#allocation2 + $0x12]]
    %s59 = sld [smem:[#allocation2 + $0x13]]
    %s60 = sld [smem:[#allocation2 + $0x14]]
    %s61 = sld [smem:[#allocation2 + $0x15]]
    %s62 = sld [smem:[#allocation2 + $0x16]]
    %s63 = sld [smem:[#allocation2 + $0x17]]
    %s64 = sld [smem:[#allocation2 + $0x18]]
    %s65 = sld [smem:[#allocation2 + $0x19]]
    %s66 = sld [smem:[#allocation2 + $0x1a]]
    %s67 = sld [smem:[#allocation2 + $0x1b]]
    %s68 = sld [smem:[#allocation2 + $0x1c]]
    %s69 = sld [smem:[#allocation2 + $0x1d]]
    %v70 = vld [vmem:[%s1] sm:$0x1]
    %v71 = vld [vmem:[#allocation6] sm:$0xff]
    %v72 = vld [vmem:[#allocation6 + $0x8] sm:$0xff]
    %v73 = vstv %s40
    %v74 = vsub.f32 %v71, %v73
    %v75 = vsub.f32 %v72, %v73
    %v76 = vmul.f32 %v74, %v74
    %v77 = vmul.f32 %v75, %v75
    %v78 = vstv %s50
    %v79 = vmul.f32 %v76, %v78
    %v80 = vmul.f32 %v77, %v78
    %v81 = vmul.f32 %v79, 1.442695
    %v82 = vpow.pop %v81
    %v83 = vmul.f32 %v80, 1.442695
    %v84 = vpow.pop %v83
    %v85 = vstv %s60
    %v86 = vmul.f32 %v82, %v85
    %v87 = vmul.f32 %v84, %v85
    %v88 = vadd.f32 %v86, 0.0
    %v89 = vadd.f32 %v87, 0.0
    %v90 = vstv %s41
    %v91 = vsub.f32 %v71, %v90
    %v92 = vsub.f32 %v72, %v90
    %v93 = vmul.f32 %v91, %v91
    %v94 = vmul.f32 %v92, %v92
    %v95 = vstv %s51
    %v96 = vmul.f32 %v93, %v95
    %v97 = vmul.f32 %v94, %v95
    %v98 = vmul.f32 %v96, 1.442695
    %v99 = vpow.pop %v98
    %v100 = vmul.f32 %v97, 1.442695
    %v101 = vpow.pop %v100
    %v102 = vstv %s61
    %v103 = vmul.f32 %v99, %v102
    %v104 = vmul.f32 %v101, %v102
    %v105 = vadd.f32 %v88, %v103
    %v106 = vadd.f32 %v89, %v104
    %v107 = vstv %s42
    %v108 = vsub.f32 %v71, %v107
    %v109 = vsub.f32 %v72, %v107
    %v110 = vmul.f32 %v108, %v108
    %v111 = vmul.f32 %v109, %v109
    %v112 = vstv %s52
    %v113 = vmul.f32 %v110, %v112
    %v114 = vmul.f32 %v111, %v112
    %v115 = vmul.f32 %v113, 1.442695
    %v116 = vpow.pop %v115
    %v117 = vmul.f32 %v114, 1.442695
    %v118 = vpow.pop %v117
    %v119 = vstv %s62
    %v120 = vmul.f32 %v116, %v119
    %v121 = vmul.f32 %v118, %v119
    %v122 = vadd.f32 %v105, %v120
    %v123 = vadd.f32 %v106, %v121
    %v124 = vstv %s43
    %v125 = vsub.f32 %v71, %v124
    %v126 = vsub.f32 %v72, %v124
    %v127 = vmul.f32 %v125, %v125
    %v128 = vmul.f32 %v126, %v126
    %v129 = vstv %s53
    %v130 = vmul.f32 %v127, %v129
    %v131 = vmul.f32 %v128, %v129
    %v132 = vmul.f32 %v130, 1.442695
    %v133 = vpow.pop %v132
    %v134 = vmul.f32 %v131, 1.442695
    %v135 = vpow.pop %v134
    %v136 = vstv %s63
    %v137 = vmul.f32 %v133, %v136
    %v138 = vmul.f32 %v135, %v136
    %v139 = vadd.f32 %v122, %v137
    %v140 = vadd.f32 %v123, %v138
    %v141 = vstv %s44
    %v142 = vsub.f32 %v71, %v141
    %v143 = vsub.f32 %v72, %v141
    %v144 = vmul.f32 %v142, %v142
    %v145 = vmul.f32 %v143, %v143
    %v146 = vstv %s54
    %v147 = vmul.f32 %v144, %v146
    %v148 = vmul.f32 %v145, %v146
    %v149 = vmul.f32 %v147, 1.442695
    %v150 = vpow.pop %v149
    %v151 = vmul.f32 %v148, 1.442695
    %v152 = vpow.pop %v151
    %v153 = vstv %s64
    %v154 = vmul.f32 %v150, %v153
    %v155 = vmul.f32 %v152, %v153
    %v156 = vadd.f32 %v139, %v154
    %v157 = vadd.f32 %v140, %v155
    %v158 = vstv %s45
    %v159 = vsub.f32 %v71, %v158
    %v160 = vsub.f32 %v72, %v158
    %v161 = vmul.f32 %v159, %v159
    %v162 = vmul.f32 %v160, %v160
    %v163 = vstv %s55
    %v164 = vmul.f32 %v161, %v163
    %v165 = vmul.f32 %v162, %v163
    %v166 = vmul.f32 %v164, 1.442695
    %v167 = vpow.pop %v166
    %v168 = vmul.f32 %v165, 1.442695
    %v169 = vpow.pop %v168
    %v170 = vstv %s65
    %v171 = vmul.f32 %v167, %v170
    %v172 = vmul.f32 %v169, %v170
    %v173 = vadd.f32 %v156, %v171
    %v174 = vadd.f32 %v157, %v172
    %v175 = vstv %s46
    %v176 = vsub.f32 %v71, %v175
    %v177 = vsub.f32 %v72, %v175
    %v178 = vmul.f32 %v176, %v176
    %v179 = vmul.f32 %v177, %v177
    %v180 = vstv %s56
    %v181 = vmul.f32 %v178, %v180
    %v182 = vmul.f32 %v179, %v180
    %v183 = vmul.f32 %v181, 1.442695
    %v184 = vpow.pop %v183
    %v185 = vmul.f32 %v182, 1.442695
    %v186 = vpow.pop %v185
    %v187 = vstv %s66
    %v188 = vmul.f32 %v184, %v187
    %v189 = vmul.f32 %v186, %v187
    %v190 = vadd.f32 %v173, %v188
    %v191 = vadd.f32 %v174, %v189
    %v192 = vstv %s47
    %v193 = vsub.f32 %v71, %v192
    %v194 = vsub.f32 %v72, %v192
    %v195 = vmul.f32 %v193, %v193
    %v196 = vmul.f32 %v194, %v194
    %v197 = vstv %s57
    %v198 = vmul.f32 %v195, %v197
    %v199 = vmul.f32 %v196, %v197
    %v200 = vmul.f32 %v198, 1.442695
    %v201 = vpow.pop %v200
    %v202 = vmul.f32 %v199, 1.442695
    %v203 = vpow.pop %v202
    %v204 = vstv %s67
    %v205 = vmul.f32 %v201, %v204
    %v206 = vmul.f32 %v203, %v204
    %v207 = vadd.f32 %v190, %v205
    %v208 = vadd.f32 %v191, %v206
    %v209 = vstv %s48
    %v210 = vsub.f32 %v71, %v209
    %v211 = vsub.f32 %v72, %v209
    %v212 = vmul.f32 %v210, %v210
    %v213 = vmul.f32 %v211, %v211
    %v214 = vstv %s58
    %v215 = vmul.f32 %v212, %v214
    %v216 = vmul.f32 %v213, %v214
    %v217 = vmul.f32 %v215, 1.442695
    %v218 = vpow.pop %v217
    %v219 = vmul.f32 %v216, 1.442695
    %v220 = vpow.pop %v219
    %v221 = vstv %s68
    %v222 = vmul.f32 %v218, %v221
    %v223 = vmul.f32 %v220, %v221
    %v224 = vadd.f32 %v207, %v222
    %v225 = vadd.f32 %v208, %v223
    %v226 = vstv %s49
    %v227 = vsub.f32 %v71, %v226
    %v228 = vsub.f32 %v72, %v226
    %v229 = vmul.f32 %v227, %v227
    %v230 = vmul.f32 %v228, %v228
    %v231 = vstv %s59
    %v232 = vmul.f32 %v229, %v231
    %v233 = vmul.f32 %v230, %v231
    %v234 = vmul.f32 %v232, 1.442695
    %v235 = vpow.pop %v234
    %v236 = vmul.f32 %v233, 1.442695
    %v237 = vpow.pop %v236
    %v238 = vstv %s69
    %v239 = vmul.f32 %v235, %v238
    %v240 = vmul.f32 %v237, %v238
    %v241 = vadd.f32 %v224, %v239
    %v242 = vadd.f32 %v225, %v240
    %v244 = vlaneseq
    %v245 = vshrl.u32 %v244, 7
    %v246 = vsub.s32 0, %v245
    %v247 = vrot.slane %v70, %v246
    %v249 = vadd.f32 %v241, %v247
    %v250 = vadd.f32 %v242, %v247
    %251 = vst [vmem:[#allocation7] sm:$0xff] %v249
    %252 = vst [vmem:[#allocation7 + $0x8] sm:$0xff] %v250
    // Predicated region
    $region22: #{tpu_custom_call.1} parent=1 // pred_check
      _
    $region23: #{tpu_custom_call.1} parent=1 // pred_check_branch
      %254 = sbr.rel (0) target = $region25
    $region24: #{tpu_custom_call.1} parent=1 // pred_region
      %s256 = ssub.s32 256, 256
      %257 = vsyncadd [#allocation4], %s256
      %s258 = sshll.u32 [#allocation7], 4
      %s259 = int_to_ptr.vmem [resolvable:$true] %s258
      %264 = dma.vmem_to_hbm [thread:$0]  %s259, 256, %s3, [#allocation4], 128, 128, 8
    $region25: #{tpu_custom_call.1} parent=1 // pred_fallthru
      _
    // Predicated region
    $region26: #{tpu_custom_call.1} parent=1 // pred_check
      _
    $region27: #{tpu_custom_call.1} parent=1 // pred_check_branch
      %266 = sbr.rel (0) target = $region29
    $region28: #{tpu_custom_call.1} parent=1 // pred_region
      %267 = dma.done [#allocation4], 256
    $region29: #{tpu_custom_call.1} parent=1 // pred_fallthru
      _
    %268 = vsyncpa [#allocation3], 1
    %269 = vsyncpa [#allocation4], 1
    %270 = vsyncpa [#allocation5], 1

</llo_original>
